<compile_context>
chip_gen: v7x
topology: tpu7x:2x2x1
jax: 0.10.0
libtpu: 0.0.40
codegen_flags: <defaults>
</compile_context>

<pallas_src>
import functools

import jax
import jax.numpy as jnp
from jax.experimental import pallas as pl
from jax.experimental.pallas import tpu as pltpu


def _round_up(x, m):
    return (x + m - 1) // m * m


def _single_buffered_spec(shape, index_map):
    """Constant-index operands (weights/biases) don't need double buffering."""
    try:
        return pl.BlockSpec(shape, index_map, pipeline_mode=pl.Buffered(1))
    except Exception:  # older jax without pipeline_mode / Buffered: fall back
        return pl.BlockSpec(shape, index_map)


def _joint_kernel(*refs, joint_method, mxu_dtype):
    if joint_method == "add":
        hp_ref, he_ref, w1_ref, b1_ref, w2_ref, b2_ref, o_ref, h_scr = refs
    else:  # 'concat' (split-weight form)
        hp_ref, he_ref, w1a_ref, w1b_ref, b1_ref, w2_ref, b2_ref, o_ref, h_scr = refs

    # Grid axis 0 = row tiles, axis 1 = vocab tiles.  The hidden activation only
    # depends on the row tile, so compute it once (first vocab tile) and stash it
    # in VMEM scratch for the remaining vocab tiles of this row tile.
    @pl.when(pl.program_id(1) == 0)
    def _():
        b1 = b1_ref[...].astype(jnp.float32)
        if joint_method == "add":
            x = hp_ref[...] + he_ref[...]
            w1 = w1_ref[...]
            if mxu_dtype is not None:
                x = x.astype(mxu_dtype)
                w1 = w1.astype(mxu_dtype)
            h = jnp.dot(x, w1, preferred_element_type=jnp.float32)
        else:
            # concat([hp, he], -1) @ W1  ==  hp @ W1[:H] + he @ W1[H:]
            hp = hp_ref[...]
            he = he_ref[...]
            w1a = w1a_ref[...]
            w1b = w1b_ref[...]
            if mxu_dtype is not None:
                hp = hp.astype(mxu_dtype)
                he = he.astype(mxu_dtype)
                w1a = w1a.astype(mxu_dtype)
                w1b = w1b.astype(mxu_dtype)
            h = jnp.dot(hp, w1a, preferred_element_type=jnp.float32)
            h = h + jnp.dot(he, w1b, preferred_element_type=jnp.float32)
        h_scr[...] = jnp.tanh(h + b1)

    # Second linear on the cached (f32) hidden activation, one vocab tile.
    w2 = w2_ref[...]
    if mxu_dtype is not None:
        h = h_scr[...].astype(mxu_dtype)
        w2 = w2.astype(mxu_dtype)
    else:
        h = h_scr[...].astype(w2.dtype)
    y = jnp.dot(h, w2, preferred_element_type=jnp.float32)
    y = y + b2_ref[...].astype(jnp.float32)
    o_ref[...] = y.astype(o_ref.dtype)


def joint_forward(h_pred, h_enc, params, joint_method="concat", tm=256, tn=2048,
                  mxu_dtype=None, out_dtype=None):
    """h_pred, h_enc: [B, T, U, H]  ->  logits [B, T, U, vocab_sz]."""
    assert h_pred.shape == h_enc.shape
    *lead, H = h_pred.shape
    N = 1
    for d in lead:
        N *= d

    w1, b1, w2, b2 = params["w1"], params["b1"], params["w2"], params["b2"]
    input_sz, joint_sz = w1.shape
    vocab_sz = w2.shape[1]
    if joint_method == "add":
        assert input_sz == H
    elif joint_method == "concat":
        assert input_sz == 2 * H
    else:
        raise ValueError("No such joint_method")

    out_dtype = out_dtype or h_pred.dtype

    # ---- padded / tiled sizes ------------------------------------------------
    tm = min(tm, _round_up(N, 8))           # don't over-pad tiny problems
    n_pad = _round_up(N, tm)                # rows padded to the row tile
    joint_pad = _round_up(joint_sz, 128)    # lane-dense hidden
    vocab_pad = _round_up(vocab_sz, 128)    # lane-dense output stores
    tn = min(tn, vocab_pad)
    vocab_pad = _round_up(vocab_pad, tn)

    hp2 = h_pred.reshape(N, H)
    he2 = h_enc.reshape(N, H)
    if n_pad != N:
        hp2 = jnp.pad(hp2, ((0, n_pad - N), (0, 0)))
        he2 = jnp.pad(he2, ((0, n_pad - N), (0, 0)))

    b1p = jnp.pad(b1, (0, joint_pad - joint_sz)).reshape(1, joint_pad)
    b2p = jnp.pad(b2, (0, vocab_pad - vocab_sz)).reshape(1, vocab_pad)
    w2p = jnp.pad(w2, ((0, joint_pad - joint_sz), (0, vocab_pad - vocab_sz)))

    if joint_method == "add":
        w1p = jnp.pad(w1, ((0, 0), (0, joint_pad - joint_sz)))
        w_inputs = (w1p,)
        w_specs = [_single_buffered_spec((H, joint_pad), lambda i, j: (0, 0))]
    else:
        # Split W1 so the kernel never concatenates along the lane axis.
        w1a = jnp.pad(w1[:H], ((0, 0), (0, joint_pad - joint_sz)))
        w1b = jnp.pad(w1[H:], ((0, 0), (0, joint_pad - joint_sz)))
        w_inputs = (w1a, w1b)
        w_specs = [_single_buffered_spec((H, joint_pad), lambda i, j: (0, 0)),
                   _single_buffered_spec((H, joint_pad), lambda i, j: (0, 0))]

    grid = (n_pad // tm, vocab_pad // tn)

    # ---- VMEM budget (double-buffered streams + resident weights + scratch) --
    in_isz = jnp.dtype(h_pred.dtype).itemsize
    w_isz = jnp.dtype(w1.dtype).itemsize
    o_isz = jnp.dtype(out_dtype).itemsize
    vmem_bytes = (
        2 * 2 * tm * H * in_isz                      # hp / he tiles (x2 buffers)
        + 2 * tm * tn * o_isz                        # output tile (x2 buffers)
        + len(w_inputs) * H * joint_pad * w_isz      # W1 (single-buffered)
        + joint_pad * w_isz                          # b1
        + 2 * (joint_pad * tn + tn) * w_isz          # W2 / b2 vocab tiles
        + tm * joint_pad * 4                         # f32 hidden scratch
    )
    vmem_limit = max(32 * 1024 * 1024,
                     min(int(1.5 * vmem_bytes) + (2 << 20), 100 * 1024 * 1024))

    kernel = functools.partial(_joint_kernel, joint_method=joint_method,
                               mxu_dtype=mxu_dtype)

    out = pl.pallas_call(
        kernel,
        out_shape=jax.ShapeDtypeStruct((n_pad, vocab_pad), out_dtype),
        grid_spec=pltpu.PrefetchScalarGridSpec(
            num_scalar_prefetch=0,
            grid=grid,
            in_specs=[
                pl.BlockSpec((tm, H), lambda i, j: (i, 0)),            # h_pred rows
                pl.BlockSpec((tm, H), lambda i, j: (i, 0)),            # h_enc rows
                *w_specs,                                              # W1 (or W1a,W1b)
                _single_buffered_spec((1, joint_pad), lambda i, j: (0, 0)),  # b1
                pl.BlockSpec((joint_pad, tn), lambda i, j: (0, j)),    # W2 vocab tile
                pl.BlockSpec((1, tn), lambda i, j: (0, j)),            # b2 vocab tile
            ],
            out_specs=pl.BlockSpec((tm, tn), lambda i, j: (i, j)),
            scratch_shapes=[pltpu.VMEM((tm, joint_pad), jnp.float32)],
        ),
        compiler_params=pltpu.CompilerParams(
            dimension_semantics=("parallel", "arbitrary"),
            vmem_limit_bytes=vmem_limit),
    )(hp2, he2, *w_inputs, b1p, w2p, b2p)

    return out[:N, :vocab_sz].reshape(*lead, vocab_sz)


def init_joint_params(key, out_sz, joint_sz, vocab_sz, joint_method="concat",
                      dtype=jnp.float32):
    """Deterministic init mirroring nn.Linear shapes (stored as [in, out])."""
    input_sz = out_sz if joint_method == "add" else 2 * out_sz
    k1, k2, k3, k4 = jax.random.split(key, 4)
    lim1 = 1.0 / jnp.sqrt(input_sz)
    lim2 = 1.0 / jnp.sqrt(joint_sz)
    return {
        "w1": jax.random.uniform(k1, (input_sz, joint_sz), dtype, -lim1, lim1),
        "b1": jax.random.uniform(k2, (joint_sz,), dtype, -lim1, lim1),
        "w2": jax.random.uniform(k3, (joint_sz, vocab_sz), dtype, -lim2, lim2),
        "b2": jax.random.uniform(k4, (vocab_sz,), dtype, -lim2, lim2),
    }


def joint_reference(h_pred, h_enc, params, joint_method="concat"):
    if joint_method == "add":
        x = h_pred + h_enc
    else:
        x = jnp.concatenate([h_pred, h_enc], axis=-1)
    h = jnp.tanh(x @ params["w1"] + params["b1"])
    return h @ params["w2"] + params["b2"]


if __name__ == "__main__":
    # Small RNN-T-like shapes: batch=2, enc-time T=4, pred-time U=8, hidden=32.
    B, T, U = 2, 4, 8
    out_sz, joint_sz, vocab_sz = 32, 64, 128

    key = jax.random.PRNGKey(0)
    kp, ke, kw = jax.random.split(key, 3)
    h_pred = jax.random.normal(kp, (B, T, U, out_sz), jnp.float32)
    h_enc = jax.random.normal(ke, (B, T, U, out_sz), jnp.float32)

    for method in ("concat", "add"):
        params = init_joint_params(kw, out_sz, joint_sz, vocab_sz, method)
        out = joint_forward(h_pred, h_enc, params, joint_method=method)
        out = jax.block_until_ready(out)
        ref = joint_reference(h_pred, h_enc, params, joint_method=method)
        assert out.shape == (B, T, U, vocab_sz)
        assert jnp.allclose(out, ref, atol=1e-4, rtol=1e-4), f"mismatch ({method})"

    print("KERNEL_OK")
</pallas_src>

<mosaic_0001>
module attributes {stable_mosaic.version = 11 : i64} {
  func.func @_joint_kernel(%arg0: i32, %arg1: i32, %arg2: memref<64x32xf32, #tpu.memory_space<vmem>>, %arg3: memref<64x32xf32, #tpu.memory_space<vmem>>, %arg4: memref<32x128xf32, #tpu.memory_space<vmem>>, %arg5: memref<32x128xf32, #tpu.memory_space<vmem>>, %arg6: memref<1x128xf32, #tpu.memory_space<vmem>>, %arg7: memref<128x128xf32, #tpu.memory_space<vmem>>, %arg8: memref<1x128xf32, #tpu.memory_space<vmem>>, %arg9: memref<64x128xf32, #tpu.memory_space<vmem>>, %arg10: memref<64x128xf32, #tpu.memory_space<vmem>>) attributes {dimension_semantics = [#tpu.dimension_semantics<parallel>, #tpu.dimension_semantics<arbitrary>], iteration_bounds = array<i64: 1, 1>, scalar_prefetch = 0 : i64, scratch_operands = 1 : i64, tpu.core_type = #tpu.core_type<tc>, window_params = [{transform_indices = @transform_0, window_bounds = array<i64: 64, 32>}, {transform_indices = @transform_1, window_bounds = array<i64: 64, 32>}, {pipeline_mode = #tpu.pipeline_mode<synchronous>, transform_indices = @transform_2, window_bounds = array<i64: 32, 128>}, {pipeline_mode = #tpu.pipeline_mode<synchronous>, transform_indices = @transform_3, window_bounds = array<i64: 32, 128>}, {pipeline_mode = #tpu.pipeline_mode<synchronous>, transform_indices = @transform_4, window_bounds = array<i64: 1, 128>}, {transform_indices = @transform_5, window_bounds = array<i64: 128, 128>}, {transform_indices = @transform_6, window_bounds = array<i64: 1, 128>}, {transform_indices = @transform_7, window_bounds = array<i64: 64, 128>}]} {
    %c0_i32 = arith.constant 0 : i32
    %0 = arith.cmpi eq, %arg1, %c0_i32 : i32
    %1 = arith.extui %0 : i1 to i32
    %c0_i32_0 = arith.constant 0 : i32
    %2 = arith.cmpi ne, %1, %c0_i32_0 : i32
    scf.if %2 {
      %c0_8 = arith.constant 0 : index
      %c0_9 = arith.constant 0 : index
      %10 = vector.load %arg6[%c0_8, %c0_9] : memref<1x128xf32, #tpu.memory_space<vmem>>, vector<1x128xf32>
      %c0_10 = arith.constant 0 : index
      %c0_11 = arith.constant 0 : index
      %11 = vector.load %arg2[%c0_10, %c0_11] : memref<64x32xf32, #tpu.memory_space<vmem>>, vector<64x32xf32>
      %c0_12 = arith.constant 0 : index
      %c0_13 = arith.constant 0 : index
      %12 = vector.load %arg3[%c0_12, %c0_13] : memref<64x32xf32, #tpu.memory_space<vmem>>, vector<64x32xf32>
      %c0_14 = arith.constant 0 : index
      %c0_15 = arith.constant 0 : index
      %13 = vector.load %arg4[%c0_14, %c0_15] : memref<32x128xf32, #tpu.memory_space<vmem>>, vector<32x128xf32>
      %c0_16 = arith.constant 0 : index
      %c0_17 = arith.constant 0 : index
      %14 = vector.load %arg5[%c0_16, %c0_17] : memref<32x128xf32, #tpu.memory_space<vmem>>, vector<32x128xf32>
      %cst_18 = arith.constant dense<0.000000e+00> : vector<64x128xf32>
      %15 = tpu.matmul %11, %13, %cst_18 {dimension_numbers = #tpu.dot_dimension_numbers<[1], [0], [0], [1], [0, 0, 1, 1], [], []>} : vector<64x32xf32>, vector<32x128xf32>, vector<64x128xf32> -> vector<64x128xf32>
      %cst_19 = arith.constant dense<0.000000e+00> : vector<64x128xf32>
      %16 = tpu.matmul %12, %14, %cst_19 {dimension_numbers = #tpu.dot_dimension_numbers<[1], [0], [0], [1], [0, 0, 1, 1], [], []>} : vector<64x32xf32>, vector<32x128xf32>, vector<64x128xf32> -> vector<64x128xf32>
      %17 = arith.addf %15, %16 : vector<64x128xf32>
      %18 = vector.broadcast %10 : vector<1x128xf32> to vector<64x128xf32>
      %19 = arith.addf %17, %18 : vector<64x128xf32>
      %20 = math.tanh %19 : vector<64x128xf32>
      %c0_20 = arith.constant 0 : index
      %c0_21 = arith.constant 0 : index
      %21 = vector.load %arg10[%c0_20, %c0_21] : memref<64x128xf32, #tpu.memory_space<vmem>>, vector<64x128xf32>
      tpu.vector_store %arg10[%c0_20, %c0_21], %20 {strides = array<i32>} : memref<64x128xf32, #tpu.memory_space<vmem>>, vector<64x128xf32>,
    } else {
    }
    %c0 = arith.constant 0 : index
    %c0_1 = arith.constant 0 : index
    %3 = vector.load %arg7[%c0, %c0_1] : memref<128x128xf32, #tpu.memory_space<vmem>>, vector<128x128xf32>
    %c0_2 = arith.constant 0 : index
    %c0_3 = arith.constant 0 : index
    %4 = vector.load %arg10[%c0_2, %c0_3] : memref<64x128xf32, #tpu.memory_space<vmem>>, vector<64x128xf32>
    %cst = arith.constant dense<0.000000e+00> : vector<64x128xf32>
    %5 = tpu.matmul %4, %3, %cst {dimension_numbers = #tpu.dot_dimension_numbers<[1], [0], [0], [1], [0, 0, 1, 1], [], []>} : vector<64x128xf32>, vector<128x128xf32>, vector<64x128xf32> -> vector<64x128xf32>
    %c0_4 = arith.constant 0 : index
    %c0_5 = arith.constant 0 : index
    %6 = vector.load %arg8[%c0_4, %c0_5] : memref<1x128xf32, #tpu.memory_space<vmem>>, vector<1x128xf32>
    %7 = vector.broadcast %6 : vector<1x128xf32> to vector<64x128xf32>
    %8 = arith.addf %5, %7 : vector<64x128xf32>
    %c0_6 = arith.constant 0 : index
    %c0_7 = arith.constant 0 : index
    %9 = vector.load %arg9[%c0_6, %c0_7] : memref<64x128xf32, #tpu.memory_space<vmem>>, vector<64x128xf32>
    tpu.vector_store %arg9[%c0_6, %c0_7], %8 {strides = array<i32>} : memref<64x128xf32, #tpu.memory_space<vmem>>, vector<64x128xf32>,
    return
  }
  func.func @transform_0(%arg0: i32, %arg1: i32) -> (i32, i32) {
    %c0_i32 = arith.constant 0 : i32
    %c0_i32_0 = arith.constant 0 : i32
    return %arg0, %c0_i32 : i32, i32
  }
  func.func @transform_1(%arg0: i32, %arg1: i32) -> (i32, i32) {
    %c0_i32 = arith.constant 0 : i32
    %c0_i32_0 = arith.constant 0 : i32
    return %arg0, %c0_i32 : i32, i32
  }
  func.func @transform_2(%arg0: i32, %arg1: i32) -> (i32, i32) {
    %c0_i32 = arith.constant 0 : i32
    %c0_i32_0 = arith.constant 0 : i32
    %c0_i32_1 = arith.constant 0 : i32
    return %c0_i32, %c0_i32_0 : i32, i32
  }
  func.func @transform_3(%arg0: i32, %arg1: i32) -> (i32, i32) {
    %c0_i32 = arith.constant 0 : i32
    %c0_i32_0 = arith.constant 0 : i32
    %c0_i32_1 = arith.constant 0 : i32
    return %c0_i32, %c0_i32_0 : i32, i32
  }
  func.func @transform_4(%arg0: i32, %arg1: i32) -> (i32, i32) {
    %c0_i32 = arith.constant 0 : i32
    %c0_i32_0 = arith.constant 0 : i32
    %c0_i32_1 = arith.constant 0 : i32
    return %c0_i32, %c0_i32_0 : i32, i32
  }
  func.func @transform_5(%arg0: i32, %arg1: i32) -> (i32, i32) {
    %c0_i32 = arith.constant 0 : i32
    %c0_i32_0 = arith.constant 0 : i32
    return %c0_i32, %arg1 : i32, i32
  }
  func.func @transform_6(%arg0: i32, %arg1: i32) -> (i32, i32) {
    %c0_i32 = arith.constant 0 : i32
    %c0_i32_0 = arith.constant 0 : i32
    return %c0_i32, %arg1 : i32, i32
  }
  func.func @transform_7(%arg0: i32, %arg1: i32) -> (i32, i32) {
    %c0_i32 = arith.constant 0 : i32
    return %arg0, %arg1 : i32, i32
  }
}

</mosaic_0001>

<llo_original>
// kernel: tpu_custom_call.1
$region0: #{tpu_custom_call.1}
  #allocation0 [shape = 'u32[]', space=smem, size = 0x4, offset = 0x4, fixed_abs, tag = 'smem constant byte address 0x4 - core index']
  #allocation1 [shape = 'u32[144,128]{1,0:T(1,128)}', space=vmem, size = 0x12000, scoped, tag = 'internal scratch']
  #allocation2 [shape = 'f32[64,128]{1,0:T(8,128)}', space=vmem, size = 0x8000, scoped, tag = 'scratch operand']
  %s0 = inlined_call_operand.vmem [shape: f32[64,32], index: 0, kind: input, shape index: {}]
  %s1 = inlined_call_operand.vmem [shape: f32[64,32], index: 1, kind: input, shape index: {}]
  %s2 = inlined_call_operand.vmem [shape: f32[32,128], index: 2, kind: input, shape index: {}]
  %s3 = inlined_call_operand.vmem [shape: f32[32,128], index: 3, kind: input, shape index: {}]
  %s4 = inlined_call_operand.vmem [shape: f32[1,128], index: 4, kind: input, shape index: {}]
  %s5 = inlined_call_operand.vmem [shape: f32[128,128], index: 5, kind: input, shape index: {}]
  %s6 = inlined_call_operand.vmem [shape: f32[1,128], index: 6, kind: input, shape index: {}]
  %s7 = inlined_call_operand.hbm [shape: f32[64,128], index: 7, kind: output, shape index: {}]
  %s8 = sld [smem:[#allocation0]]
  $region42: #{tpu_custom_call.1} parent=0
    _
  %s10 = ssub.s32 1, %s8
  %s11 = scalar_select 0, %s10, %s8
  $region1: #{tpu_custom_call.1} parent=0
    #allocation3 [shape = 'u8[32768]{0}', space=vmem, size = 0x8000, scoped, tag = 'output window, operand 0, single buffered']
    #allocation4 [shape = 's32[1]{0}', space=sflag, size = 0x4, scoped, tag = 'scoped memory for tpu_custom_call.1']
    %12 = vsyncpa [#allocation4], 0
    // Predicated region
    $region2: #{tpu_custom_call.1} parent=1 // pred_check
      _
    $region3: #{tpu_custom_call.1} parent=1 // pred_check_branch
      %14 = sbr.rel (0) target = $region5
    $region4: #{tpu_custom_call.1} parent=1 // pred_region
      _
    $region5: #{tpu_custom_call.1} parent=1 // pred_fallthru
      _
    // Predicated region
    $region6: #{tpu_custom_call.1} parent=1 // pred_check
      _
    $region7: #{tpu_custom_call.1} parent=1 // pred_check_branch
      %16 = sbr.rel (0) target = $region9
    $region8: #{tpu_custom_call.1} parent=1 // pred_region
      _
    $region9: #{tpu_custom_call.1} parent=1 // pred_fallthru
      _
    // Predicated region
    $region10: #{tpu_custom_call.1} parent=1 // pred_check
      _
    $region11: #{tpu_custom_call.1} parent=1 // pred_check_branch
      %18 = sbr.rel (0) target = $region13
    $region12: #{tpu_custom_call.1} parent=1 // pred_region
      _
    $region13: #{tpu_custom_call.1} parent=1 // pred_fallthru
      _
    // Predicated region
    $region14: #{tpu_custom_call.1} parent=1 // pred_check
      _
    $region15: #{tpu_custom_call.1} parent=1 // pred_check_branch
      %20 = sbr.rel (0) target = $region17
    $region16: #{tpu_custom_call.1} parent=1 // pred_region
      _
    $region17: #{tpu_custom_call.1} parent=1 // pred_fallthru
      _
    // Predicated region
    $region18: #{tpu_custom_call.1} parent=1 // pred_check
      _
    $region19: #{tpu_custom_call.1} parent=1 // pred_check_branch
      %22 = sbr.rel (0) target = $region21
    $region20: #{tpu_custom_call.1} parent=1 // pred_region
      _
    $region21: #{tpu_custom_call.1} parent=1 // pred_fallthru
      _
    // Predicated region
    $region22: #{tpu_custom_call.1} parent=1 // pred_check
      _
    $region23: #{tpu_custom_call.1} parent=1 // pred_check_branch
      %24 = sbr.rel (0) target = $region25
    $region24: #{tpu_custom_call.1} parent=1 // pred_region
      _
    $region25: #{tpu_custom_call.1} parent=1 // pred_fallthru
      _
    // Predicated region
    $region26: #{tpu_custom_call.1} parent=1 // pred_check
      _
    $region27: #{tpu_custom_call.1} parent=1 // pred_check_branch
      %26 = sbr.rel (0) target = $region29
    $region28: #{tpu_custom_call.1} parent=1 // pred_region
      _
    $region29: #{tpu_custom_call.1} parent=1 // pred_fallthru
      _
    %p27 = scmp.eq.s32.totalorder 0, 0
    // Predicated region
    $region30: #{tpu_custom_call.1} parent=1 // pred_check
      %p28 = pneg %p27
    $region31: #{tpu_custom_call.1} parent=1 // pred_check_branch
      %30 = sbr.rel (%p28) target = $region33
    $region32: #{tpu_custom_call.1} parent=1 // pred_region
      %v31 = vld [vmem:[%s4] sm:$0x1]
      %v32 = vld [vmem:[%s0] sm:$0xff]
      %v33 = vld [vmem:[%s0 + $0x8] sm:$0xff]
      %v34 = vld [vmem:[%s0 + $0x10] sm:$0xff]
      %v35 = vld [vmem:[%s0 + $0x18] sm:$0xff]
      %v36 = vld [vmem:[%s0 + $0x20] sm:$0xff]
      %v37 = vld [vmem:[%s0 + $0x28] sm:$0xff]
      %v38 = vld [vmem:[%s0 + $0x30] sm:$0xff]
      %v39 = vld [vmem:[%s0 + $0x38] sm:$0xff]
      %v40 = vld [vmem:[%s1] sm:$0xff]
      %v41 = vld [vmem:[%s1 + $0x8] sm:$0xff]
      %v42 = vld [vmem:[%s1 + $0x10] sm:$0xff]
      %v43 = vld [vmem:[%s1 + $0x18] sm:$0xff]
      %v44 = vld [vmem:[%s1 + $0x20] sm:$0xff]
      %v45 = vld [vmem:[%s1 + $0x28] sm:$0xff]
      %v46 = vld [vmem:[%s1 + $0x30] sm:$0xff]
      %v47 = vld [vmem:[%s1 + $0x38] sm:$0xff]
      %v48 = vld [vmem:[%s2] sm:$0xff]
      %v49 = vld [vmem:[%s2 + $0x8] sm:$0xff]
      %v50 = vld [vmem:[%s2 + $0x10] sm:$0xff]
      %v51 = vld [vmem:[%s2 + $0x18] sm:$0xff]
      %v52 = vld [vmem:[%s3] sm:$0xff]
      %v53 = vld [vmem:[%s3 + $0x8] sm:$0xff]
      %v54 = vld [vmem:[%s3 + $0x10] sm:$0xff]
      %v55 = vld [vmem:[%s3 + $0x18] sm:$0xff]
      %vm56 = vcmask 261120
      %v58 = vsel %vm56, %v40, 0
      %v61 = vsel %vm56, %v41, 0
      %v64 = vsel %vm56, %v42, 0
      %v67 = vsel %vm56, %v43, 0
      %v70 = vsel %vm56, %v44, 0
      %v73 = vsel %vm56, %v45, 0
      %v76 = vsel %vm56, %v46, 0
      %v79 = vsel %vm56, %v47, 0
      %81 = vmatprep.subr.mxu0 0.0
      %82 = vmatpush1.msra.mxu0 %v52
      %83 = vmatprep.subr.mxu0 0.0
      %84 = vmatpush1.msra.mxu0 %v53
      %85 = vmatprep.subr.mxu0 0.0
      %86 = vmatpush1.msra.mxu0 %v54
      %87 = vmatprep.subr.mxu0 0.0
      %88 = vmatpush1.msra.mxu0 %v55
      %89 = vmatprep.subr.mxu0 0.0
      %90 = vmatpush1.msra.mxu0 0.0
      %91 = vmatprep.subr.mxu0 0.0
      %92 = vmatpush1.msra.mxu0 0.0
      %93 = vmatprep.subr.mxu0 0.0
      %94 = vmatpush1.msra.mxu0 0.0
      %95 = vmatprep.subr.mxu0 0.0
      %96 = vmatpush1.msra.mxu0 0.0
      %97 = vmatprep.subr.mxu0 0.0
      %98 = vmatpush1.msra.mxu0 0.0
      %99 = vmatprep.subr.mxu0 0.0
      %100 = vmatpush1.msra.mxu0 0.0
      %101 = vmatprep.subr.mxu0 0.0
      %102 = vmatpush1.msra.mxu0 0.0
      %103 = vmatprep.subr.mxu0 0.0
      %104 = vmatpush1.msra.mxu0 0.0
      %105 = vmatprep.subr.mxu0 0.0
      %106 = vmatpush1.msra.mxu0 0.0
      %107 = vmatprep.subr.mxu0 0.0
      %108 = vmatpush1.msra.mxu0 0.0
      %109 = vmatprep.subr.mxu0 0.0
      %110 = vmatpush1.msra.mxu0 0.0
      %111 = vmatprep.subr.mxu0 0.0
      %112 = vmatpush1.msra.mxu0 0.0
      %113 = vmatprep.subr.mxu0 0.0
      %114 = vmatpush1.msra.mxu0 0.0
      %115 = vmatprep.subr.mxu0 0.0
      %116 = vmatpush1.msra.mxu0 0.0
      %117 = vmatprep.subr.mxu0 0.0
      %118 = vmatpush1.msra.mxu0 0.0
      %119 = vmatprep.subr.mxu0 0.0
      %120 = vmatpush1.msra.mxu0 0.0
      %121 = vmatprep.subr.mxu0 0.0
      %122 = vmatpush1.msra.mxu0 0.0
      %123 = vmatprep.subr.mxu0 0.0
      %124 = vmatpush1.msra.mxu0 0.0
      %125 = vmatprep.subr.mxu0 0.0
      %126 = vmatpush1.msra.mxu0 0.0
      %127 = vmatprep.subr.mxu0 0.0
      %128 = vmatpush1.msra.mxu0 0.0
      %129 = vmatprep.subr.mxu0 0.0
      %130 = vmatpush1.msra.mxu0 0.0
      %131 = vmatprep.subr.mxu0 0.0
      %132 = vmatpush1.msra.mxu0 0.0
      %133 = vmatprep.subr.mxu0 0.0
      %134 = vmatpush1.msra.mxu0 0.0
      %135 = vmatprep.subr.mxu0 0.0
      %136 = vmatpush1.msra.mxu0 0.0
      %137 = vmatprep.subr.mxu0 0.0
      %138 = vmatpush1.msra.mxu0 0.0
      %139 = vmatprep.subr.mxu0 0.0
      %140 = vmatpush1.msra.mxu0 0.0
      %141 = vmatprep.subr.mxu0 0.0
      %142 = vmatpush1.msra.mxu0 0.0
      %143 = vmatprep.subr.mxu0 0.0
      %144 = vmatpush1.msra.mxu0 0.0
      %145 = vmatprep.mubr.f32.mxu0 0.0
      %146 = vmatmul.mubr.f32.gmra.mrb[0].mxu0 %v58
      %v147 = vpop.f32.mrb[0].mxu0
      %v148 = vadd.f32 0.0, %v147
      %v149 = vpop.f32.mrb[0].mxu0
      %150 = vmatprep.mubr.f32.mxu0 0.0
      %151 = vmatmul.mubr.f32.gmra.mrb[0].mxu0 %v61
      %v152 = vpop.f32.mrb[0].mxu0
      %v153 = vadd.f32 0.0, %v152
      %v154 = vpop.f32.mrb[0].mxu0
      %155 = vmatprep.mubr.f32.mxu0 0.0
      %156 = vmatmul.mubr.f32.gmra.mrb[0].mxu0 %v64
      %v157 = vpop.f32.mrb[0].mxu0
      %v158 = vadd.f32 0.0, %v157
      %v159 = vpop.f32.mrb[0].mxu0
      %160 = vmatprep.mubr.f32.mxu0 0.0
      %161 = vmatmul.mubr.f32.gmra.mrb[0].mxu0 %v67
      %v162 = vpop.f32.mrb[0].mxu0
      %v163 = vadd.f32 0.0, %v162
      %v164 = vpop.f32.mrb[0].mxu0
      %165 = vmatprep.mubr.f32.mxu0 0.0
      %166 = vmatmul.mubr.f32.gmra.mrb[0].mxu0 %v70
      %v167 = vpop.f32.mrb[0].mxu0
      %v168 = vadd.f32 0.0, %v167
      %v169 = vpop.f32.mrb[0].mxu0
      %170 = vmatprep.mubr.f32.mxu0 0.0
      %171 = vmatmul.mubr.f32.gmra.mrb[0].mxu0 %v73
      %v172 = vpop.f32.mrb[0].mxu0
      %v173 = vadd.f32 0.0, %v172
      %v174 = vpop.f32.mrb[0].mxu0
      %175 = vmatprep.mubr.f32.mxu0 0.0
      %176 = vmatmul.mubr.f32.gmra.mrb[0].mxu0 %v76
      %v177 = vpop.f32.mrb[0].mxu0
      %v178 = vadd.f32 0.0, %v177
      %v179 = vpop.f32.mrb[0].mxu0
      %180 = vmatprep.mubr.f32.mxu0 0.0
      %181 = vmatmul.mubr.f32.gmra.mrb[0].mxu0 %v79
      %v182 = vpop.f32.mrb[0].mxu0
      %v183 = vadd.f32 0.0, %v182
      %v184 = vpop.f32.mrb[0].mxu0
      %185 = vdwg.mxu0
      %v187 = vsel %vm56, %v32, 0
      %v190 = vsel %vm56, %v33, 0
      %v193 = vsel %vm56, %v34, 0
      %v196 = vsel %vm56, %v35, 0
      %v199 = vsel %vm56, %v36, 0
      %v202 = vsel %vm56, %v37, 0
      %v205 = vsel %vm56, %v38, 0
      %v208 = vsel %vm56, %v39, 0
      %210 = vmatprep.subr.mxu0 0.0
      %211 = vmatpush1.msra.mxu0 %v48
      %212 = vmatprep.subr.mxu0 0.0
      %213 = vmatpush1.msra.mxu0 %v49
      %214 = vmatprep.subr.mxu0 0.0
      %215 = vmatpush1.msra.mxu0 %v50
      %216 = vmatprep.subr.mxu0 0.0
      %217 = vmatpush1.msra.mxu0 %v51
      %218 = vmatprep.subr.mxu0 0.0
      %219 = vmatpush1.msra.mxu0 0.0
      %220 = vmatprep.subr.mxu0 0.0
      %221 = vmatpush1.msra.mxu0 0.0
      %222 = vmatprep.subr.mxu0 0.0
      %223 = vmatpush1.msra.mxu0 0.0
      %224 = vmatprep.subr.mxu0 0.0
      %225 = vmatpush1.msra.mxu0 0.0
      %226 = vmatprep.subr.mxu0 0.0
      %227 = vmatpush1.msra.mxu0 0.0
      %228 = vmatprep.subr.mxu0 0.0
      %229 = vmatpush1.msra.mxu0 0.0
      %230 = vmatprep.subr.mxu0 0.0
      %231 = vmatpush1.msra.mxu0 0.0
      %232 = vmatprep.subr.mxu0 0.0
      %233 = vmatpush1.msra.mxu0 0.0
      %234 = vmatprep.subr.mxu0 0.0
      %235 = vmatpush1.msra.mxu0 0.0
      %236 = vmatprep.subr.mxu0 0.0
      %237 = vmatpush1.msra.mxu0 0.0
      %238 = vmatprep.subr.mxu0 0.0
      %239 = vmatpush1.msra.mxu0 0.0
      %240 = vmatprep.subr.mxu0 0.0
      %241 = vmatpush1.msra.mxu0 0.0
      %242 = vmatprep.subr.mxu0 0.0
      %243 = vmatpush1.msra.mxu0 0.0
      %244 = vmatprep.subr.mxu0 0.0
      %245 = vmatpush1.msra.mxu0 0.0
      %246 = vmatprep.subr.mxu0 0.0
      %247 = vmatpush1.msra.mxu0 0.0
      %248 = vmatprep.subr.mxu0 0.0
      %249 = vmatpush1.msra.mxu0 0.0
      %250 = vmatprep.subr.mxu0 0.0
      %251 = vmatpush1.msra.mxu0 0.0
      %252 = vmatprep.subr.mxu0 0.0
      %253 = vmatpush1.msra.mxu0 0.0
      %254 = vmatprep.subr.mxu0 0.0
      %255 = vmatpush1.msra.mxu0 0.0
      %256 = vmatprep.subr.mxu0 0.0
      %257 = vmatpush1.msra.mxu0 0.0
      %258 = vmatprep.subr.mxu0 0.0
      %259 = vmatpush1.msra.mxu0 0.0
      %260 = vmatprep.subr.mxu0 0.0
      %261 = vmatpush1.msra.mxu0 0.0
      %262 = vmatprep.subr.mxu0 0.0
      %263 = vmatpush1.msra.mxu0 0.0
      %264 = vmatprep.subr.mxu0 0.0
      %265 = vmatpush1.msra.mxu0 0.0
      %266 = vmatprep.subr.mxu0 0.0
      %267 = vmatpush1.msra.mxu0 0.0
      %268 = vmatprep.subr.mxu0 0.0
      %269 = vmatpush1.msra.mxu0 0.0
      %270 = vmatprep.subr.mxu0 0.0
      %271 = vmatpush1.msra.mxu0 0.0
      %272 = vmatprep.subr.mxu0 0.0
      %273 = vmatpush1.msra.mxu0 0.0
      %274 = vmatprep.mubr.f32.mxu0 0.0
      %275 = vmatmul.mubr.f32.gmra.mrb[0].mxu0 %v187
      %v276 = vpop.f32.mrb[0].mxu0
      %v277 = vadd.f32 %v148, %v276
      %v278 = vpop.f32.mrb[0].mxu0
      %279 = vmatprep.mubr.f32.mxu0 0.0
      %280 = vmatmul.mubr.f32.gmra.mrb[0].mxu0 %v190
      %v281 = vpop.f32.mrb[0].mxu0
      %v282 = vadd.f32 %v153, %v281
      %v283 = vpop.f32.mrb[0].mxu0
      %284 = vmatprep.mubr.f32.mxu0 0.0
      %285 = vmatmul.mubr.f32.gmra.mrb[0].mxu0 %v193
      %v286 = vpop.f32.mrb[0].mxu0
      %v287 = vadd.f32 %v158, %v286
      %v288 = vpop.f32.mrb[0].mxu0
      %289 = vmatprep.mubr.f32.mxu0 0.0
      %290 = vmatmul.mubr.f32.gmra.mrb[0].mxu0 %v196
      %v291 = vpop.f32.mrb[0].mxu0
      %v292 = vadd.f32 %v163, %v291
      %v293 = vpop.f32.mrb[0].mxu0
      %294 = vmatprep.mubr.f32.mxu0 0.0
      %295 = vmatmul.mubr.f32.gmra.mrb[0].mxu0 %v199
      %v296 = vpop.f32.mrb[0].mxu0
      %v297 = vadd.f32 %v168, %v296
      %v298 = vpop.f32.mrb[0].mxu0
      %299 = vmatprep.mubr.f32.mxu0 0.0
      %300 = vmatmul.mubr.f32.gmra.mrb[0].mxu0 %v202
      %v301 = vpop.f32.mrb[0].mxu0
      %v302 = vadd.f32 %v173, %v301
      %v303 = vpop.f32.mrb[0].mxu0
      %304 = vmatprep.mubr.f32.mxu0 0.0
      %305 = vmatmul.mubr.f32.gmra.mrb[0].mxu0 %v205
      %v306 = vpop.f32.mrb[0].mxu0
      %v307 = vadd.f32 %v178, %v306
      %v308 = vpop.f32.mrb[0].mxu0
      %309 = vmatprep.mubr.f32.mxu0 0.0
      %310 = vmatmul.mubr.f32.gmra.mrb[0].mxu0 %v208
      %v311 = vpop.f32.mrb[0].mxu0
      %v312 = vadd.f32 %v183, %v311
      %v313 = vpop.f32.mrb[0].mxu0
      %314 = vdwg.mxu0
      %v316 = vlaneseq
      %v317 = vshrl.u32 %v316, 7
      %v318 = vsub.s32 0, %v317
      %v319 = vrot.slane %v31, %v318
      %v321 = vadd.f32 %v277, %v319
      %v322 = vadd.f32 %v282, %v319
      %v323 = vadd.f32 %v287, %v319
      %v324 = vadd.f32 %v292, %v319
      %v325 = vadd.f32 %v297, %v319
      %v326 = vadd.f32 %v302, %v319
      %v327 = vadd.f32 %v307, %v319
      %v328 = vadd.f32 %v312, %v319
      %v329 = vtanh.pop %v321
      %v330 = vtanh.pop %v322
      %v331 = vtanh.pop %v323
      %v332 = vtanh.pop %v324
      %v333 = vtanh.pop %v325
      %v334 = vtanh.pop %v326
      %v335 = vtanh.pop %v327
      %v336 = vtanh.pop %v328
      %337 = vst [vmem:[#allocation2] sm:$0xff] %v329
      %338 = vst [vmem:[#allocation2 + $0x8] sm:$0xff] %v330
      %339 = vst [vmem:[#allocation2 + $0x10] sm:$0xff] %v331
      %340 = vst [vmem:[#allocation2 + $0x18] sm:$0xff] %v332
      %341 = vst [vmem:[#allocation2 + $0x20] sm:$0xff] %v333
      %342 = vst [vmem:[#allocation2 + $0x28] sm:$0xff] %v334
      %343 = vst [vmem:[#allocation2 + $0x30] sm:$0xff] %v335
      %344 = vst [vmem:[#allocation2 + $0x38] sm:$0xff] %v336
    $region33: #{tpu_custom_call.1} parent=1 // pred_fallthru
      _
    %v345 = vld [vmem:[%s5] sm:$0xff]
    %v346 = vld [vmem:[%s5 + $0x8] sm:$0xff]
    %v347 = vld [vmem:[%s5 + $0x10] sm:$0xff]
    %v348 = vld [vmem:[%s5 + $0x18] sm:$0xff]
    %v349 = vld [vmem:[%s5 + $0x20] sm:$0xff]
    %v350 = vld [vmem:[%s5 + $0x28] sm:$0xff]
    %v351 = vld [vmem:[%s5 + $0x30] sm:$0xff]
    %v352 = vld [vmem:[%s5 + $0x38] sm:$0xff]
    %v353 = vld [vmem:[%s5 + $0x40] sm:$0xff]
    %v354 = vld [vmem:[%s5 + $0x48] sm:$0xff]
    %v355 = vld [vmem:[%s5 + $0x50] sm:$0xff]
    %v356 = vld [vmem:[%s5 + $0x58] sm:$0xff]
    %v357 = vld [vmem:[%s5 + $0x60] sm:$0xff]
    %v358 = vld [vmem:[%s5 + $0x68] sm:$0xff]
    %v359 = vld [vmem:[%s5 + $0x70] sm:$0xff]
    %v360 = vld [vmem:[%s5 + $0x78] sm:$0xff]
    %v361 = vld [vmem:[#allocation2] sm:$0xff]
    %v362 = vld [vmem:[#allocation2 + $0x8] sm:$0xff]
    %v363 = vld [vmem:[#allocation2 + $0x10] sm:$0xff]
    %v364 = vld [vmem:[#allocation2 + $0x18] sm:$0xff]
    %v365 = vld [vmem:[#allocation2 + $0x20] sm:$0xff]
    %v366 = vld [vmem:[#allocation2 + $0x28] sm:$0xff]
    %v367 = vld [vmem:[#allocation2 + $0x30] sm:$0xff]
    %v368 = vld [vmem:[#allocation2 + $0x38] sm:$0xff]
    %v369 = vld [vmem:[%s6] sm:$0x1]
    %v371 = vlaneseq
    %v372 = vshrl.u32 %v371, 7
    %v373 = vsub.s32 0, %v372
    %v374 = vrot.slane %v369, %v373
    %376 = vmatprep.subr.mxu0 0.0
    %377 = vmatpush1.msra.mxu0 %v345
    %378 = vmatprep.subr.mxu0 0.0
    %379 = vmatpush1.msra.mxu0 %v346
    %380 = vmatprep.subr.mxu0 0.0
    %381 = vmatpush1.msra.mxu0 %v347
    %382 = vmatprep.subr.mxu0 0.0
    %383 = vmatpush1.msra.mxu0 %v348
    %384 = vmatprep.subr.mxu0 0.0
    %385 = vmatpush1.msra.mxu0 %v349
    %386 = vmatprep.subr.mxu0 0.0
    %387 = vmatpush1.msra.mxu0 %v350
    %388 = vmatprep.subr.mxu0 0.0
    %389 = vmatpush1.msra.mxu0 %v351
    %390 = vmatprep.subr.mxu0 0.0
    %391 = vmatpush1.msra.mxu0 %v352
    %392 = vmatprep.subr.mxu0 0.0
    %393 = vmatpush1.msra.mxu0 %v353
    %394 = vmatprep.subr.mxu0 0.0
    %395 = vmatpush1.msra.mxu0 %v354
    %396 = vmatprep.subr.mxu0 0.0
    %397 = vmatpush1.msra.mxu0 %v355
    %398 = vmatprep.subr.mxu0 0.0
    %399 = vmatpush1.msra.mxu0 %v356
    %400 = vmatprep.subr.mxu0 0.0
    %401 = vmatpush1.msra.mxu0 %v357
    %402 = vmatprep.subr.mxu0 0.0
    %403 = vmatpush1.msra.mxu0 %v358
    %404 = vmatprep.subr.mxu0 0.0
    %405 = vmatpush1.msra.mxu0 %v359
    %406 = vmatprep.subr.mxu0 0.0
    %407 = vmatpush1.msra.mxu0 %v360
    %408 = vmatprep.subr.mxu0 0.0
    %409 = vmatpush1.msra.mxu0 0.0
    %410 = vmatprep.subr.mxu0 0.0
    %411 = vmatpush1.msra.mxu0 0.0
    %412 = vmatprep.subr.mxu0 0.0
    %413 = vmatpush1.msra.mxu0 0.0
    %414 = vmatprep.subr.mxu0 0.0
    %415 = vmatpush1.msra.mxu0 0.0
    %416 = vmatprep.subr.mxu0 0.0
    %417 = vmatpush1.msra.mxu0 0.0
    %418 = vmatprep.subr.mxu0 0.0
    %419 = vmatpush1.msra.mxu0 0.0
    %420 = vmatprep.subr.mxu0 0.0
    %421 = vmatpush1.msra.mxu0 0.0
    %422 = vmatprep.subr.mxu0 0.0
    %423 = vmatpush1.msra.mxu0 0.0
    %424 = vmatprep.subr.mxu0 0.0
    %425 = vmatpush1.msra.mxu0 0.0
    %426 = vmatprep.subr.mxu0 0.0
    %427 = vmatpush1.msra.mxu0 0.0
    %428 = vmatprep.subr.mxu0 0.0
    %429 = vmatpush1.msra.mxu0 0.0
    %430 = vmatprep.subr.mxu0 0.0
    %431 = vmatpush1.msra.mxu0 0.0
    %432 = vmatprep.subr.mxu0 0.0
    %433 = vmatpush1.msra.mxu0 0.0
    %434 = vmatprep.subr.mxu0 0.0
    %435 = vmatpush1.msra.mxu0 0.0
    %436 = vmatprep.subr.mxu0 0.0
    %437 = vmatpush1.msra.mxu0 0.0
    %438 = vmatprep.subr.mxu0 0.0
    %439 = vmatpush1.msra.mxu0 0.0
    %440 = vmatprep.mubr.f32.mxu0 0.0
    %441 = vmatmul.mubr.f32.gmra.mrb[0].mxu0 %v361
    %v442 = vpop.f32.mrb[0].mxu0
    %v443 = vadd.f32 %v374, %v442
    %v444 = vpop.f32.mrb[0].mxu0
    %445 = vmatprep.mubr.f32.mxu0 0.0
    %446 = vmatmul.mubr.f32.gmra.mrb[0].mxu0 %v362
    %v447 = vpop.f32.mrb[0].mxu0
    %v448 = vadd.f32 %v374, %v447
    %v449 = vpop.f32.mrb[0].mxu0
    %450 = vmatprep.mubr.f32.mxu0 0.0
    %451 = vmatmul.mubr.f32.gmra.mrb[0].mxu0 %v363
    %v452 = vpop.f32.mrb[0].mxu0
    %v453 = vadd.f32 %v374, %v452
    %v454 = vpop.f32.mrb[0].mxu0
    %455 = vmatprep.mubr.f32.mxu0 0.0
    %456 = vmatmul.mubr.f32.gmra.mrb[0].mxu0 %v364
    %v457 = vpop.f32.mrb[0].mxu0
    %v458 = vadd.f32 %v374, %v457
    %v459 = vpop.f32.mrb[0].mxu0
    %460 = vmatprep.mubr.f32.mxu0 0.0
    %461 = vmatmul.mubr.f32.gmra.mrb[0].mxu0 %v365
    %v462 = vpop.f32.mrb[0].mxu0
    %v463 = vadd.f32 %v374, %v462
    %v464 = vpop.f32.mrb[0].mxu0
    %465 = vmatprep.mubr.f32.mxu0 0.0
    %466 = vmatmul.mubr.f32.gmra.mrb[0].mxu0 %v366
    %v467 = vpop.f32.mrb[0].mxu0
    %v468 = vadd.f32 %v374, %v467
    %v469 = vpop.f32.mrb[0].mxu0
    %470 = vmatprep.mubr.f32.mxu0 0.0
    %471 = vmatmul.mubr.f32.gmra.mrb[0].mxu0 %v367
    %v472 = vpop.f32.mrb[0].mxu0
    %v473 = vadd.f32 %v374, %v472
    %v474 = vpop.f32.mrb[0].mxu0
    %475 = vmatprep.mubr.f32.mxu0 0.0
    %476 = vmatmul.mubr.f32.gmra.mrb[0].mxu0 %v368
    %v477 = vpop.f32.mrb[0].mxu0
    %v478 = vadd.f32 %v374, %v477
    %v479 = vpop.f32.mrb[0].mxu0
    %480 = vdwg.mxu0
    %481 = vst [vmem:[#allocation3] sm:$0xff] %v443
    %482 = vst [vmem:[#allocation3 + $0x8] sm:$0xff] %v448
    %483 = vst [vmem:[#allocation3 + $0x10] sm:$0xff] %v453
    %484 = vst [vmem:[#allocation3 + $0x18] sm:$0xff] %v458
    %485 = vst [vmem:[#allocation3 + $0x20] sm:$0xff] %v463
    %486 = vst [vmem:[#allocation3 + $0x28] sm:$0xff] %v468
    %487 = vst [vmem:[#allocation3 + $0x30] sm:$0xff] %v473
    %488 = vst [vmem:[#allocation3 + $0x38] sm:$0xff] %v478
    // Predicated region
    $region34: #{tpu_custom_call.1} parent=1 // pred_check
      _
    $region35: #{tpu_custom_call.1} parent=1 // pred_check_branch
      %490 = sbr.rel (0) target = $region37
    $region36: #{tpu_custom_call.1} parent=1 // pred_region
      %s492 = ssub.s32 1024, 1024
      %493 = vsyncadd [#allocation4], %s492
      %s494 = sshll.u32 [#allocation3], 4
      %s495 = int_to_ptr.vmem [resolvable:$true] %s494
      %500 = dma.vmem_to_hbm [thread:$0]  %s495, 1024, %s7, [#allocation4], 128, 128, 8
    $region37: #{tpu_custom_call.1} parent=1 // pred_fallthru
      _
    // Predicated region
    $region38: #{tpu_custom_call.1} parent=1 // pred_check
      _
    $region39: #{tpu_custom_call.1} parent=1 // pred_check_branch
      %502 = sbr.rel (0) target = $region41
    $region40: #{tpu_custom_call.1} parent=1 // pred_region
      %503 = dma.done [#allocation4], 1024
    $region41: #{tpu_custom_call.1} parent=1 // pred_fallthru
      _
    %504 = vsyncpa [#allocation4], 1

</llo_original>
